<compile_context>
chip_gen: v5e
topology: v5e:2x2
jax: 0.10.0
libtpu: 0.0.40
codegen_flags: <defaults>
</compile_context>

<pallas_src>
import functools

import jax
import jax.numpy as jnp
from jax.experimental import pallas as pl
from jax.experimental.pallas import tpu as pltpu


def _round_up(x, m):
    return ((x + m - 1) // m) * m


def _pick_hidden_tile(requested, padded_dim):
    # padded_dim is a multiple of 128; return the largest multiple of 128
    # that is <= requested and divides padded_dim.
    t = max(128, (min(requested, padded_dim) // 128) * 128)
    while padded_dim % t != 0:
        t -= 128
    return t


def _residual_linear_kernel(x_mm_ref, w_ref, x_res_ref, b_ref, o_ref, acc_ref,
                            *, mm_dtype):
    # x_mm_ref : (tm, tk)  K-slice of x (matmul lhs)
    # w_ref    : (tk, tn)  weight tile
    # x_res_ref: (tm, tn)  residual slice of x (same N columns as the output)
    # b_ref    : (1,  tn)  bias tile
    # o_ref    : (tm, tn)  output tile (resident across the K axis)
    # acc_ref  : (tm, tn)  f32 accumulator scratch
    k = pl.program_id(2)

    @pl.when(k == 0)
    def _init():
        acc_ref[...] = jnp.zeros_like(acc_ref)

    xk = x_mm_ref[...]
    wk = w_ref[...]
    if mm_dtype is not None:          # bf16 operands on v6e/v7x, f32 accumulate
        xk = xk.astype(mm_dtype)
        wk = wk.astype(mm_dtype)
    acc_ref[...] += jnp.dot(xk, wk, preferred_element_type=jnp.float32)  # MXU

    @pl.when(k == pl.num_programs(2) - 1)
    def _finalize():
        y = (acc_ref[...]
             + b_ref[...].astype(jnp.float32)
             + x_res_ref[...].astype(jnp.float32))
        o_ref[...] = y.astype(o_ref.dtype)


def residual_linear(x, w, b, *, tm=256, tn=256, tk=256, mm_dtype=None):
    """out = x + (x @ w + b), fused in one Pallas kernel.

    x : [B, S, H]
    w : [H, H]   (input-major, i.e. PyTorch nn.Linear weight transposed)
    b : [H]
    mm_dtype : optional dtype for the MXU operands (e.g. jnp.bfloat16 on
               v6e / v7x); accumulation is always f32.
    """
    B, S, H = x.shape
    M = B * S

    # ---- tile selection (lane-dense hidden dim, 8-aligned rows) ----------
    Hp = _round_up(H, 128)
    tn = _pick_hidden_tile(tn, Hp)
    tk = _pick_hidden_tile(tk, Hp)
    tm = max(8, (tm // 8) * 8)
    tm = min(tm, _round_up(M, 8))
    Mp = _round_up(M, tm)

    # ---- pad inputs (zero padding is exact for this op) ------------------
    x2d = x.reshape(M, H)
    if (Mp, Hp) != (M, H):
        x2d = jnp.pad(x2d, ((0, Mp - M), (0, Hp - H)))
    wp = jnp.pad(w, ((0, Hp - H), (0, Hp - H))) if Hp != H else w
    bp = (jnp.pad(b, (0, Hp - H)) if Hp != H else b).reshape(1, Hp)

    # ---- VMEM budget for the chosen tiles (double-buffered by BlockSpec) -
    xsz = jnp.dtype(x.dtype).itemsize
    wsz = jnp.dtype(w.dtype).itemsize
    est = (2 * tm * tk * xsz          # x (matmul operand)
           + 2 * tk * tn * wsz        # weight tile
           + 2 * tm * tn * xsz        # x (residual operand)
           + 2 * tn * wsz             # bias
           + 2 * tm * tn * xsz        # output
           + tm * tn * 4)             # f32 accumulator scratch
    vmem_limit = int(min(64 << 20, max(2 * est, 32 << 20)))

    grid = (Mp // tm, Hp // tn, Hp // tk)

    out2d = pl.pallas_call(
        functools.partial(_residual_linear_kernel, mm_dtype=mm_dtype),
        out_shape=jax.ShapeDtypeStruct((Mp, Hp), x.dtype),
        grid_spec=pltpu.PrefetchScalarGridSpec(
            num_scalar_prefetch=0,
            grid=grid,
            in_specs=[
                pl.BlockSpec((tm, tk), lambda i, j, k: (i, k)),  # x (lhs)
                pl.BlockSpec((tk, tn), lambda i, j, k: (k, j)),  # weight
                pl.BlockSpec((tm, tn), lambda i, j, k: (i, j)),  # x (residual)
                pl.BlockSpec((1, tn), lambda i, j, k: (0, j)),   # bias
            ],
            out_specs=pl.BlockSpec((tm, tn), lambda i, j, k: (i, j)),
            scratch_shapes=[pltpu.VMEM((tm, tn), jnp.float32)],
        ),
        compiler_params=pltpu.CompilerParams(
            dimension_semantics=("parallel", "parallel", "arbitrary"),
            vmem_limit_bytes=vmem_limit,
        ),
    )(x2d, wp, x2d, bp)

    return out2d[:M, :H].reshape(B, S, H)


def residual_linear_ref(x, w, b):
    return x + (jnp.einsum("bsh,ho->bso", x, w) + b)


if __name__ == "__main__":
    B, S, H = 2, 8, 32

    key = jax.random.PRNGKey(0)
    kx, kw, kb = jax.random.split(key, 3)

    x = jax.random.normal(kx, (B, S, H), dtype=jnp.float32)
    # Deterministic "Linear" parameters (synthetic, uniform like torch init).
    bound = 1.0 / (H ** 0.5)
    w = jax.random.uniform(kw, (H, H), minval=-bound, maxval=bound,
                           dtype=jnp.float32)
    b = jax.random.uniform(kb, (H,), minval=-bound, maxval=bound,
                           dtype=jnp.float32)

    ref = residual_linear_ref(x, w, b)

    # Exact-precision path (operands stay f32).
    out = jax.block_until_ready(residual_linear(x, w, b))
    assert out.shape == (B, S, H)
    assert jnp.allclose(out, ref, atol=1e-5, rtol=1e-5), "mismatch vs reference"

    # bf16-operand MXU path (recommended on v6e / v7x); f32 accumulation.
    out_bf16 = jax.block_until_ready(
        residual_linear(x, w, b, mm_dtype=jnp.bfloat16))
    assert jnp.allclose(out_bf16, ref, atol=2e-2, rtol=2e-2), \
        "bf16 path outside tolerance"

    print("KERNEL_OK")
</pallas_src>

<mosaic_0001>
module attributes {stable_mosaic.version = 11 : i64} {
  func.func @_residual_linear_kernel(%arg0: i32, %arg1: i32, %arg2: i32, %arg3: memref<16x128xf32, #tpu.memory_space<vmem>>, %arg4: memref<128x128xf32, #tpu.memory_space<vmem>>, %arg5: memref<16x128xf32, #tpu.memory_space<vmem>>, %arg6: memref<1x128xf32, #tpu.memory_space<vmem>>, %arg7: memref<16x128xf32, #tpu.memory_space<vmem>>, %arg8: memref<16x128xf32, #tpu.memory_space<vmem>>) attributes {dimension_semantics = [#tpu.dimension_semantics<parallel>, #tpu.dimension_semantics<parallel>, #tpu.dimension_semantics<arbitrary>], iteration_bounds = array<i64: 1, 1, 1>, scalar_prefetch = 0 : i64, scratch_operands = 1 : i64, tpu.core_type = #tpu.core_type<tc>, window_params = [{transform_indices = @transform_0, window_bounds = array<i64: 16, 128>}, {transform_indices = @transform_1, window_bounds = array<i64: 128, 128>}, {transform_indices = @transform_2, window_bounds = array<i64: 16, 128>}, {transform_indices = @transform_3, window_bounds = array<i64: 1, 128>}, {transform_indices = @transform_4, window_bounds = array<i64: 16, 128>}]} {
    %c0_i32 = arith.constant 0 : i32
    %0 = arith.cmpi eq, %arg2, %c0_i32 : i32
    %1 = arith.extui %0 : i1 to i32
    %c0_i32_0 = arith.constant 0 : i32
    %2 = arith.cmpi ne, %1, %c0_i32_0 : i32
    scf.if %2 {
      %cst_10 = arith.constant 0.000000e+00 : f32
      %12 = vector.broadcast %cst_10 : f32 to vector<16x128xf32>
      %c0_11 = arith.constant 0 : index
      %c0_12 = arith.constant 0 : index
      %13 = vector.load %arg8[%c0_11, %c0_12] : memref<16x128xf32, #tpu.memory_space<vmem>>, vector<16x128xf32>
      tpu.vector_store %arg8[%c0_11, %c0_12], %12 {strides = array<i32>} : memref<16x128xf32, #tpu.memory_space<vmem>>, vector<16x128xf32>,
    } else {
    }
    %c0 = arith.constant 0 : index
    %c0_1 = arith.constant 0 : index
    %3 = vector.load %arg3[%c0, %c0_1] : memref<16x128xf32, #tpu.memory_space<vmem>>, vector<16x128xf32>
    %c0_2 = arith.constant 0 : index
    %c0_3 = arith.constant 0 : index
    %4 = vector.load %arg4[%c0_2, %c0_3] : memref<128x128xf32, #tpu.memory_space<vmem>>, vector<128x128xf32>
    %c0_4 = arith.constant 0 : index
    %c0_5 = arith.constant 0 : index
    %5 = vector.load %arg8[%c0_4, %c0_5] : memref<16x128xf32, #tpu.memory_space<vmem>>, vector<16x128xf32>
    %cst = arith.constant dense<0.000000e+00> : vector<16x128xf32>
    %6 = tpu.matmul %3, %4, %cst {dimension_numbers = #tpu.dot_dimension_numbers<[1], [0], [0], [1], [0, 0, 1, 1], [], []>} : vector<16x128xf32>, vector<128x128xf32>, vector<16x128xf32> -> vector<16x128xf32>
    %7 = arith.addf %5, %6 : vector<16x128xf32>
    %c0_6 = arith.constant 0 : index
    %c0_7 = arith.constant 0 : index
    %8 = vector.load %arg8[%c0_6, %c0_7] : memref<16x128xf32, #tpu.memory_space<vmem>>, vector<16x128xf32>
    tpu.vector_store %arg8[%c0_6, %c0_7], %7 {strides = array<i32>} : memref<16x128xf32, #tpu.memory_space<vmem>>, vector<16x128xf32>,
    %c0_i32_8 = arith.constant 0 : i32
    %9 = arith.cmpi eq, %arg2, %c0_i32_8 : i32
    %10 = arith.extui %9 : i1 to i32
    %c0_i32_9 = arith.constant 0 : i32
    %11 = arith.cmpi ne, %10, %c0_i32_9 : i32
    scf.if %11 {
      %c0_10 = arith.constant 0 : index
      %c0_11 = arith.constant 0 : index
      %12 = vector.load %arg8[%c0_10, %c0_11] : memref<16x128xf32, #tpu.memory_space<vmem>>, vector<16x128xf32>
      %c0_12 = arith.constant 0 : index
      %c0_13 = arith.constant 0 : index
      %13 = vector.load %arg6[%c0_12, %c0_13] : memref<1x128xf32, #tpu.memory_space<vmem>>, vector<1x128xf32>
      %14 = vector.broadcast %13 : vector<1x128xf32> to vector<16x128xf32>
      %15 = arith.addf %12, %14 : vector<16x128xf32>
      %c0_14 = arith.constant 0 : index
      %c0_15 = arith.constant 0 : index
      %16 = vector.load %arg5[%c0_14, %c0_15] : memref<16x128xf32, #tpu.memory_space<vmem>>, vector<16x128xf32>
      %17 = arith.addf %15, %16 : vector<16x128xf32>
      %c0_16 = arith.constant 0 : index
      %c0_17 = arith.constant 0 : index
      %18 = vector.load %arg7[%c0_16, %c0_17] : memref<16x128xf32, #tpu.memory_space<vmem>>, vector<16x128xf32>
      tpu.vector_store %arg7[%c0_16, %c0_17], %17 {strides = array<i32>} : memref<16x128xf32, #tpu.memory_space<vmem>>, vector<16x128xf32>,
    } else {
    }
    return
  }
  func.func @transform_0(%arg0: i32, %arg1: i32, %arg2: i32) -> (i32, i32) {
    %c0_i32 = arith.constant 0 : i32
    return %arg0, %arg2 : i32, i32
  }
  func.func @transform_1(%arg0: i32, %arg1: i32, %arg2: i32) -> (i32, i32) {
    %c0_i32 = arith.constant 0 : i32
    return %arg2, %arg1 : i32, i32
  }
  func.func @transform_2(%arg0: i32, %arg1: i32, %arg2: i32) -> (i32, i32) {
    %c0_i32 = arith.constant 0 : i32
    return %arg0, %arg1 : i32, i32
  }
  func.func @transform_3(%arg0: i32, %arg1: i32, %arg2: i32) -> (i32, i32) {
    %c0_i32 = arith.constant 0 : i32
    %c0_i32_0 = arith.constant 0 : i32
    return %c0_i32, %arg1 : i32, i32
  }
  func.func @transform_4(%arg0: i32, %arg1: i32, %arg2: i32) -> (i32, i32) {
    %c0_i32 = arith.constant 0 : i32
    return %arg0, %arg1 : i32, i32
  }
}

</mosaic_0001>

<llo_original>
// kernel: tpu_custom_call.1
$region0: #{tpu_custom_call.1}
  #allocation0 [shape = 'u32[]', space=smem, size = 0x4, offset = 0x4, fixed_abs, tag = 'smem constant byte address 0x4 - core index']
  #allocation1 [shape = 'u32[72,128]{1,0:T(1,128)}', space=vmem, size = 0x9000, scoped, tag = 'internal scratch']
  #allocation2 [shape = 'f32[16,128]{1,0:T(8,128)}', space=vmem, size = 0x2000, scoped, tag = 'scratch operand']
  %s0 = inlined_call_operand.hbm [shape: f32[16,128], index: 0, kind: input, shape index: {}]
  %s1 = inlined_call_operand.hbm [shape: f32[128,128], index: 1, kind: input, shape index: {}]
  %s2 = inlined_call_operand.hbm [shape: f32[16,128], index: 2, kind: input, shape index: {}]
  %s3 = inlined_call_operand.vmem [shape: f32[1,128], index: 3, kind: input, shape index: {}]
  %s4 = inlined_call_operand.hbm [shape: f32[16,128], index: 4, kind: output, shape index: {}]
  %s5 = sld [smem:[#allocation0]]
  $region46: #{tpu_custom_call.1} parent=0
    _
  %s7 = ssub.s32 1, %s5
  %s8 = scalar_select 0, %s7, %s5
  $region1: #{tpu_custom_call.1} parent=0
    #allocation3 [shape = 'u8[8192]{0}', space=vmem, size = 0x2000, scoped, tag = 'input window, operand 0, single buffered']
    #allocation4 [shape = 's32[1]{0}', space=sflag, size = 0x4, scoped, tag = 'scoped memory for tpu_custom_call.1']
    #allocation5 [shape = 's32[1]{0}', space=sflag, size = 0x4, scoped, tag = 'scoped memory for tpu_custom_call.1']
    #allocation6 [shape = 'u8[65536]{0}', space=vmem, size = 0x10000, scoped, tag = 'input window, operand 1, single buffered']
    #allocation7 [shape = 's32[1]{0}', space=sflag, size = 0x4, scoped, tag = 'scoped memory for tpu_custom_call.1']
    #allocation8 [shape = 'u8[8192]{0}', space=vmem, size = 0x2000, scoped, tag = 'input window, operand 2, single buffered']
    #allocation9 [shape = 'u8[8192]{0}', space=vmem, size = 0x2000, scoped, tag = 'output window, operand 0, single buffered']
    %9 = vsyncpa [#allocation4], 0
    %10 = vsyncpa [#allocation7], 0
    %11 = vsyncpa [#allocation5], 0
    // Predicated region
    $region2: #{tpu_custom_call.1} parent=1 // pred_check
      _
    $region3: #{tpu_custom_call.1} parent=1 // pred_check_branch
      %13 = sbr.rel (0) target = $region5
    $region4: #{tpu_custom_call.1} parent=1 // pred_region
      %15 = vsyncadd [#allocation4], 0
      %s16 = sshll.u32 %s0, 4
      %s17 = int_to_ptr.hbm [resolvable:$true] %s16
      %s18 = sshll.u32 [#allocation3], 4
      %s19 = int_to_ptr.vmem [resolvable:$true] %s18
      %24 = dma.hbm_to_vmem [thread:$0]  %s17, 256, %s19, [#allocation4], 128, 128, 8
    $region5: #{tpu_custom_call.1} parent=1 // pred_fallthru
      _
    // Predicated region
    $region6: #{tpu_custom_call.1} parent=1 // pred_check
      _
    $region7: #{tpu_custom_call.1} parent=1 // pred_check_branch
      %26 = sbr.rel (0) target = $region9
    $region8: #{tpu_custom_call.1} parent=1 // pred_region
      %28 = vsyncadd [#allocation7], 0
      %s29 = sshll.u32 %s1, 4
      %s30 = int_to_ptr.hbm [resolvable:$true] %s29
      %s31 = sshll.u32 [#allocation6], 4
      %s32 = int_to_ptr.vmem [resolvable:$true] %s31
      %37 = dma.hbm_to_vmem [thread:$0]  %s30, 2048, %s32, [#allocation7], 128, 128, 8
    $region9: #{tpu_custom_call.1} parent=1 // pred_fallthru
      _
    // Predicated region
    $region10: #{tpu_custom_call.1} parent=1 // pred_check
      _
    $region11: #{tpu_custom_call.1} parent=1 // pred_check_branch
      %39 = sbr.rel (0) target = $region13
    $region12: #{tpu_custom_call.1} parent=1 // pred_region
      %41 = vsyncadd [#allocation7], 0
      %s42 = sshll.u32 %s2, 4
      %s43 = int_to_ptr.hbm [resolvable:$true] %s42
      %s44 = sshll.u32 [#allocation8], 4
      %s45 = int_to_ptr.vmem [resolvable:$true] %s44
      %50 = dma.hbm_to_vmem [thread:$0]  %s43, 256, %s45, [#allocation7], 128, 128, 8
    $region13: #{tpu_custom_call.1} parent=1 // pred_fallthru
      _
    // Predicated region
    $region14: #{tpu_custom_call.1} parent=1 // pred_check
      _
    $region15: #{tpu_custom_call.1} parent=1 // pred_check_branch
      %52 = sbr.rel (0) target = $region17
    $region16: #{tpu_custom_call.1} parent=1 // pred_region
      _
    $region17: #{tpu_custom_call.1} parent=1 // pred_fallthru
      _
    // Predicated region
    $region18: #{tpu_custom_call.1} parent=1 // pred_check
      _
    $region19: #{tpu_custom_call.1} parent=1 // pred_check_branch
      %54 = sbr.rel (0) target = $region21
    $region20: #{tpu_custom_call.1} parent=1 // pred_region
      %56 = dma.done [#allocation4], 256
    $region21: #{tpu_custom_call.1} parent=1 // pred_fallthru
      _
    // Predicated region
    $region22: #{tpu_custom_call.1} parent=1 // pred_check
      _
    $region23: #{tpu_custom_call.1} parent=1 // pred_check_branch
      %58 = sbr.rel (0) target = $region25
    $region24: #{tpu_custom_call.1} parent=1 // pred_region
      %60 = dma.done [#allocation7], 2048
    $region25: #{tpu_custom_call.1} parent=1 // pred_fallthru
      _
    // Predicated region
    $region26: #{tpu_custom_call.1} parent=1 // pred_check
      _
    $region27: #{tpu_custom_call.1} parent=1 // pred_check_branch
      %62 = sbr.rel (0) target = $region29
    $region28: #{tpu_custom_call.1} parent=1 // pred_region
      %64 = dma.done [#allocation7], 256
    $region29: #{tpu_custom_call.1} parent=1 // pred_fallthru
      _
    %p65 = scmp.eq.s32.totalorder 0, 0
    // Predicated region
    $region30: #{tpu_custom_call.1} parent=1 // pred_check
      %p66 = pneg %p65
    $region31: #{tpu_custom_call.1} parent=1 // pred_check_branch
      %68 = sbr.rel (%p66) target = $region33
    $region32: #{tpu_custom_call.1} parent=1 // pred_region
      %69 = vst [vmem:[#allocation2] sm:$0xff] 0.0
      %70 = vst [vmem:[#allocation2 + $0x8] sm:$0xff] 0.0
    $region33: #{tpu_custom_call.1} parent=1 // pred_fallthru
      _
    %v71 = vld [vmem:[#allocation3] sm:$0xff]
    %v72 = vld [vmem:[#allocation3 + $0x8] sm:$0xff]
    %v73 = vld [vmem:[#allocation6] sm:$0xff]
    %v74 = vld [vmem:[#allocation6 + $0x8] sm:$0xff]
    %v75 = vld [vmem:[#allocation6 + $0x10] sm:$0xff]
    %v76 = vld [vmem:[#allocation6 + $0x18] sm:$0xff]
    %v77 = vld [vmem:[#allocation6 + $0x20] sm:$0xff]
    %v78 = vld [vmem:[#allocation6 + $0x28] sm:$0xff]
    %v79 = vld [vmem:[#allocation6 + $0x30] sm:$0xff]
    %v80 = vld [vmem:[#allocation6 + $0x38] sm:$0xff]
    %v81 = vld [vmem:[#allocation6 + $0x40] sm:$0xff]
    %v82 = vld [vmem:[#allocation6 + $0x48] sm:$0xff]
    %v83 = vld [vmem:[#allocation6 + $0x50] sm:$0xff]
    %v84 = vld [vmem:[#allocation6 + $0x58] sm:$0xff]
    %v85 = vld [vmem:[#allocation6 + $0x60] sm:$0xff]
    %v86 = vld [vmem:[#allocation6 + $0x68] sm:$0xff]
    %v87 = vld [vmem:[#allocation6 + $0x70] sm:$0xff]
    %v88 = vld [vmem:[#allocation6 + $0x78] sm:$0xff]
    %v89 = vld [vmem:[#allocation2] sm:$0xff]
    %v90 = vld [vmem:[#allocation2 + $0x8] sm:$0xff]
    %91 = vmatpush.msra.mxu0 %v88
    %92 = vmatpush.msra.mxu0 %v87
    %93 = vmatpush.msra.mxu0 %v86
    %94 = vmatpush.msra.mxu0 %v85
    %95 = vmatpush.msra.mxu0 %v84
    %96 = vmatpush.msra.mxu0 %v83
    %97 = vmatpush.msra.mxu0 %v82
    %98 = vmatpush.msra.mxu0 %v81
    %99 = vmatpush.msra.mxu0 %v80
    %100 = vmatpush.msra.mxu0 %v79
    %101 = vmatpush.msra.mxu0 %v78
    %102 = vmatpush.msra.mxu0 %v77
    %103 = vmatpush.msra.mxu0 %v76
    %104 = vmatpush.msra.mxu0 %v75
    %105 = vmatpush.msra.mxu0 %v74
    %106 = vmatpush.msra.mxu0 %v73
    %107 = vmatmul.f32.gmra.mxu0 %v71
    %v108 = vpop.f32.mrf.mxu0
    %v109 = vadd.f32 0.0, %v108
    %110 = vmatmul.f32.gmra.mxu0 %v72
    %v111 = vpop.f32.mrf.mxu0
    %v112 = vadd.f32 0.0, %v111
    %113 = vdwg.mxu0
    %v114 = vadd.f32 %v89, %v109
    %v115 = vadd.f32 %v90, %v112
    %116 = vst [vmem:[#allocation2] sm:$0xff] %v114
    %117 = vst [vmem:[#allocation2 + $0x8] sm:$0xff] %v115
    // Predicated region
    $region34: #{tpu_custom_call.1} parent=1 // pred_check
      %p118 = pneg %p65
    $region35: #{tpu_custom_call.1} parent=1 // pred_check_branch
      %120 = sbr.rel (%p118) target = $region37
    $region36: #{tpu_custom_call.1} parent=1 // pred_region
      %v121 = vld [vmem:[#allocation2] sm:$0xff]
      %v122 = vld [vmem:[#allocation2 + $0x8] sm:$0xff]
      %v123 = vld [vmem:[%s3] sm:$0x1]
      %v125 = vperm.slane %v123, 0
      %v127 = vadd.f32 %v121, %v125
      %v128 = vadd.f32 %v122, %v125
      %v129 = vld [vmem:[#allocation8] sm:$0xff]
      %v130 = vld [vmem:[#allocation8 + $0x8] sm:$0xff]
      %v131 = vadd.f32 %v127, %v129
      %v132 = vadd.f32 %v128, %v130
      %133 = vst [vmem:[#allocation9] sm:$0xff] %v131
      %134 = vst [vmem:[#allocation9 + $0x8] sm:$0xff] %v132
    $region37: #{tpu_custom_call.1} parent=1 // pred_fallthru
      _
    // Predicated region
    $region38: #{tpu_custom_call.1} parent=1 // pred_check
      _
    $region39: #{tpu_custom_call.1} parent=1 // pred_check_branch
      %136 = sbr.rel (0) target = $region41
    $region40: #{tpu_custom_call.1} parent=1 // pred_region
      %138 = vsyncadd [#allocation5], 0
      %s139 = sshll.u32 [#allocation9], 4
      %s140 = int_to_ptr.vmem [resolvable:$true] %s139
      %s141 = sshll.u32 %s4, 4
      %s142 = int_to_ptr.hbm [resolvable:$true] %s141
      %147 = dma.vmem_to_hbm [thread:$0]  %s140, 256, %s142, [#allocation5], 128, 128, 8
    $region41: #{tpu_custom_call.1} parent=1 // pred_fallthru
      _
    // Predicated region
    $region42: #{tpu_custom_call.1} parent=1 // pred_check
      _
    $region43: #{tpu_custom_call.1} parent=1 // pred_check_branch
      %149 = sbr.rel (0) target = $region45
    $region44: #{tpu_custom_call.1} parent=1 // pred_region
      %151 = dma.done [#allocation5], 256
    $region45: #{tpu_custom_call.1} parent=1 // pred_fallthru
      _
    %152 = vsyncpa [#allocation4], 1
    %153 = vsyncpa [#allocation7], 1
    %154 = vsyncpa [#allocation5], 1

</llo_original>
